<compile_context>
chip_gen: v7x
topology: tpu7x:2x2x1
jax: 0.10.0
libtpu: 0.0.40
codegen_flags: <defaults>
</compile_context>

<pallas_src>
import jax
import jax.numpy as jnp
from jax.experimental import pallas as pl
from jax.experimental.pallas import tpu as pltpu


# --------------------------------------------------------------------------- #
# Kernel
# --------------------------------------------------------------------------- #
def attention_fusion_kernel(x1_ref, x2_ref, wv_ref, bv_ref, wc_ref, bc_ref,
                            o_ref, acc_ref):
    k = pl.program_id(1)

    @pl.when(k == 0)
    def _init():
        acc_ref[...] = jnp.zeros_like(acc_ref)

    # embedding_v : Linear -> Tanh  (Dropout is identity in eval mode).
    v = jnp.tanh(
        jnp.dot(x2_ref[...].astype(jnp.bfloat16), wv_ref[...],
                preferred_element_type=jnp.float32)
        + bv_ref[...])

    # seq == 1  =>  softmax over the singleton axis == 1  =>  attention out == v.
    # embedding_common contribution of this K-chunk, accumulated in f32.
    acc_ref[...] += jnp.dot(v.astype(jnp.bfloat16), wc_ref[...],
                            preferred_element_type=jnp.float32)

    @pl.when(k == pl.num_programs(1) - 1)
    def _finalize():
        o_ref[...] = (acc_ref[...] + bc_ref[...]
                      + x1_ref[...].astype(jnp.float32)).astype(o_ref.dtype)


# --------------------------------------------------------------------------- #
# Helpers
# --------------------------------------------------------------------------- #
def _ceil8(n):
    return ((n + 7) // 8) * 8


def _spec(shape, index_map, buffers=None):
    """BlockSpec with an optional explicit buffer count (graceful fallback)."""
    if buffers is None:
        return pl.BlockSpec(shape, index_map)
    try:
        return pl.BlockSpec(shape, index_map, pipeline_mode=pl.Buffered(buffers))
    except (TypeError, AttributeError):
        # Older jax without pipeline_mode: fall back to default double-buffering.
        return pl.BlockSpec(shape, index_map)


def _vmem_capacity_bytes():
    try:
        return int(pltpu.get_tpu_info().vmem_capacity_bytes)
    except Exception:
        return 64 << 20  # conservative: v7x per-TensorCore capacity


def _vmem_needed(tb, D, tk, nk, x1_bytes, x2_bytes):
    """Working-set bytes with the *actual* pipeline buffer counts."""
    wbuf = 1 if nk == 1 else 2                                  # weight buffers
    act = tb * D * (2 * x1_bytes + 2 * x2_bytes + 2 * 4 + 4)    # x1, x2, out, acc
    wgt = wbuf * 2 * (D * tk * 2)                               # Wv + Wc, bf16
    bias = (2 if nk > 1 else 1) * 8 * tk * 4 + 8 * D * 4        # 8-sublane padded
    return act + wgt + bias


# --------------------------------------------------------------------------- #
# Wrapper
# --------------------------------------------------------------------------- #
def attention_fusion(x1, x2, params, *, block_b=None, block_k=None, alias_x1=False):
    """Fused eval-mode AttentionFusion forward: tanh(x2 @ Wv + bv) @ Wc + bc + x1.

    x1: (B, D) residual stream (f32 recommended).  x2: (B, D); bf16 recommended
    since the MXU consumes bf16 anyway and streaming bf16 halves its HBM bytes.
    params: bf16 (in, out) weights wv/wc, f32 biases bv/bc of shape (1, D).
    """
    B, D = x1.shape
    assert x2.shape == (B, D)
    wv, bv, wc, bc = params["wv"], params["bv"], params["wc"], params["bc"]
    assert wv.shape == (D, D) and wc.shape == (D, D)
    assert bv.shape == (1, D) and bc.shape == (1, D)
    if alias_x1:
        assert x1.dtype == jnp.float32, "x1/out aliasing requires f32 x1"

    capacity = _vmem_capacity_bytes()
    budget = (capacity * 5) // 8                     # ~40 MiB on v7x, ~80 MiB v5e/v6e
    if block_b is None:
        block_b = 1024 if capacity > (96 << 20) else 512

    x1_bytes = jnp.dtype(x1.dtype).itemsize
    x2_bytes = jnp.dtype(x2.dtype).itemsize

    # --- batch tile: multiple of 8; at least two grid steps whenever B allows ---
    tb = min(block_b, B)
    if B > 8:
        tb = min(tb, _ceil8(pl.cdiv(B, 2)))
        tb = max(8, (tb // 8) * 8)

    # --- K (qkv-dim) tile: full D unless the working set would blow the budget ---
    if block_k is not None:
        if D % block_k != 0 or (block_k % 128 != 0 and block_k != D):
            raise ValueError("block_k must divide D and be a multiple of 128")
        tk = block_k
    else:
        tk = D
    while _vmem_needed(tb, D, tk, D // tk, x1_bytes, x2_bytes) > budget:
        if block_k is None and tk % 256 == 0:
            tk //= 2                                  # K-chunk the weights first
        elif tb >= 16:
            tb = max(8, ((tb // 2) // 8) * 8)
        else:
            break
    nk = D // tk

    needed = _vmem_needed(tb, D, tk, nk, x1_bytes, x2_bytes)
    vmem_limit = min(max(int(needed * 1.35), 32 << 20), capacity - (16 << 20))
    if needed > vmem_limit:
        raise ValueError(
            f"AttentionFusion working set ({needed >> 20} MiB) does not fit the "
            f"VMEM budget ({vmem_limit >> 20} MiB); reduce block_b / block_k.")

    grid = (pl.cdiv(B, tb), nk)                       # ragged last batch block OK
    w_buffers = 1 if nk == 1 else None                # single-buffer constant blocks

    in_specs = [
        _spec((tb, D), lambda i, k: (i, 0)),                  # x1
        _spec((tb, D), lambda i, k: (i, 0)),                  # x2
        _spec((D, tk), lambda i, k: (0, k), w_buffers),       # Wv
        _spec((1, tk), lambda i, k: (0, k), w_buffers),       # bv
        _spec((tk, D), lambda i, k: (k, 0), w_buffers),       # Wc
        _spec((1, D), lambda i, k: (0, 0), 1),                # bc (always constant)
    ]
    out_spec = _spec((tb, D), lambda i, k: (i, 0))

    cost = pl.CostEstimate(
        flops=2 * 2 * B * D * D,                              # two (B,D)x(D,D) matmuls
        transcendentals=B * D,                                # tanh
        bytes_accessed=B * D * (x1_bytes + x2_bytes + 4) + 2 * D * D * 2 + 2 * D * 4,
    )

    return pl.pallas_call(
        attention_fusion_kernel,
        out_shape=jax.ShapeDtypeStruct((B, D), jnp.float32),
        grid_spec=pltpu.PrefetchScalarGridSpec(
            num_scalar_prefetch=0,
            grid=grid,
            in_specs=in_specs,
            out_specs=out_spec,
            scratch_shapes=[pltpu.VMEM((tb, D), jnp.float32)],
        ),
        compiler_params=pltpu.CompilerParams(
            dimension_semantics=("parallel", "arbitrary"),
            vmem_limit_bytes=int(vmem_limit),
        ),
        cost_estimate=cost,
        input_output_aliases=({0: 0} if alias_x1 else {}),
    )(x1, x2, wv, bv, wc, bc)


# --------------------------------------------------------------------------- #
# Parameters and references
# --------------------------------------------------------------------------- #
def init_params(key, embed_dim):
    """Deterministic synthetic parameters (torch nn.Linear-style init).
    Weights stored (in, out) so the kernel computes x @ W + b (== torch x @ W_t.T + b).
    MXU-feeding weights are stored bf16; biases stay f32."""
    ks = jax.random.split(key, 8)
    s = 1.0 / jnp.sqrt(jnp.float32(embed_dim))
    mk_w = lambda k: jax.random.uniform(k, (embed_dim, embed_dim), jnp.float32, -s, s)
    mk_b = lambda k: jax.random.uniform(k, (1, embed_dim), jnp.float32, -s, s)
    return {
        # q/k parameters exist in the torch module but are mathematically unused
        # in the eval forward (softmax over a singleton seq axis is identically 1).
        "wq": mk_w(ks[0]), "bq": mk_b(ks[1]),
        "wk": mk_w(ks[2]), "bk": mk_b(ks[3]),
        "wv": mk_w(ks[4]).astype(jnp.bfloat16), "bv": mk_b(ks[5]),
        "wc": mk_w(ks[6]).astype(jnp.bfloat16), "bc": mk_b(ks[7]),
    }


def reference_matched(x1, x2, p):
    """Same numerics as the kernel (bf16 MXU inputs, f32 accumulate)."""
    v = jnp.tanh(jnp.dot(x2.astype(jnp.bfloat16), p["wv"],
                         preferred_element_type=jnp.float32) + p["bv"])
    return (jnp.dot(v.astype(jnp.bfloat16), p["wc"],
                    preferred_element_type=jnp.float32) + p["bc"]
            + x1.astype(jnp.float32))


def reference_f32(x1, x2_f32, p):
    """Full-f32 eval-mode module math (q/k branch folds away: softmax over seq==1 is 1)."""
    v = jnp.tanh(x2_f32 @ p["wv"].astype(jnp.float32) + p["bv"])
    return v @ p["wc"].astype(jnp.float32) + p["bc"] + x1


# --------------------------------------------------------------------------- #
# Demo / self-check
# --------------------------------------------------------------------------- #
if __name__ == "__main__":
    B, D = 40, 256            # ragged batch (exercises cdiv masking), lane-dense D
    key = jax.random.PRNGKey(0)
    k1, k2, kp = jax.random.split(key, 3)
    x1 = jax.random.normal(k1, (B, D), jnp.float32)
    x2_f32 = jax.random.normal(k2, (B, D), jnp.float32)
    x2 = x2_f32.astype(jnp.bfloat16)      # "producer emits bf16": halves x2 HBM bytes
    params = init_params(kp, D)

    # Path 1: weight-resident (nk == 1), single-buffered weights, 2 ragged batch blocks.
    out1 = jax.block_until_ready(attention_fusion(x1, x2, params))
    # Path 2: K-chunked accumulator path (nk == 2), exercises pl.when init/finalize.
    out2 = jax.block_until_ready(attention_fusion(x1, x2, params, block_b=16, block_k=128))

    ref = reference_matched(x1, x2, params)
    ref32 = reference_f32(x1, x2_f32, params)
    for out in (out1, out2):
        assert out.shape == (B, D) and out.dtype == jnp.float32
        assert jnp.allclose(out, ref, atol=2e-3, rtol=2e-3), \
            float(jnp.max(jnp.abs(out - ref)))
        assert jnp.allclose(out, ref32, atol=3e-2, rtol=3e-2), \
            float(jnp.max(jnp.abs(out - ref32)))
    print("KERNEL_OK")
</pallas_src>

<mosaic_0001>
module attributes {stable_mosaic.version = 11 : i64} {
  func.func @attention_fusion_kernel(%arg0: i32, %arg1: i32, %arg2: memref<24x256xf32, #tpu.memory_space<vmem>>, %arg3: memref<24x256xbf16, #tpu.memory_space<vmem>>, %arg4: memref<256x256xbf16, #tpu.memory_space<vmem>>, %arg5: memref<1x256xf32, #tpu.memory_space<vmem>>, %arg6: memref<256x256xbf16, #tpu.memory_space<vmem>>, %arg7: memref<1x256xf32, #tpu.memory_space<vmem>>, %arg8: memref<24x256xf32, #tpu.memory_space<vmem>>, %arg9: memref<24x256xf32, #tpu.memory_space<vmem>>) attributes {dimension_semantics = [#tpu.dimension_semantics<parallel>, #tpu.dimension_semantics<arbitrary>], iteration_bounds = array<i64: 2, 1>, scalar_prefetch = 0 : i64, scratch_operands = 1 : i64, tpu.core_type = #tpu.core_type<tc>, window_params = [{transform_indices = @transform_0, window_bounds = array<i64: 24, 256>}, {transform_indices = @transform_1, window_bounds = array<i64: 24, 256>}, {pipeline_mode = #tpu.pipeline_mode<synchronous>, transform_indices = @transform_2, window_bounds = array<i64: 256, 256>}, {pipeline_mode = #tpu.pipeline_mode<synchronous>, transform_indices = @transform_3, window_bounds = array<i64: 1, 256>}, {pipeline_mode = #tpu.pipeline_mode<synchronous>, transform_indices = @transform_4, window_bounds = array<i64: 256, 256>}, {pipeline_mode = #tpu.pipeline_mode<synchronous>, transform_indices = @transform_5, window_bounds = array<i64: 1, 256>}, {transform_indices = @transform_6, window_bounds = array<i64: 24, 256>}]} {
    %c0_i32 = arith.constant 0 : i32
    %0 = arith.cmpi eq, %arg1, %c0_i32 : i32
    %1 = arith.extui %0 : i1 to i32
    %c0_i32_0 = arith.constant 0 : i32
    %2 = arith.cmpi ne, %1, %c0_i32_0 : i32
    scf.if %2 {
      %cst_15 = arith.constant 0.000000e+00 : f32
      %19 = vector.broadcast %cst_15 : f32 to vector<24x256xf32>
      %c0_16 = arith.constant 0 : index
      %c0_17 = arith.constant 0 : index
      %20 = vector.load %arg9[%c0_16, %c0_17] : memref<24x256xf32, #tpu.memory_space<vmem>>, vector<24x256xf32>
      tpu.vector_store %arg9[%c0_16, %c0_17], %19 {strides = array<i32>} : memref<24x256xf32, #tpu.memory_space<vmem>>, vector<24x256xf32>,
    } else {
    }
    %c0 = arith.constant 0 : index
    %c0_1 = arith.constant 0 : index
    %3 = vector.load %arg3[%c0, %c0_1] : memref<24x256xbf16, #tpu.memory_space<vmem>>, vector<24x256xbf16>
    %c0_2 = arith.constant 0 : index
    %c0_3 = arith.constant 0 : index
    %4 = vector.load %arg4[%c0_2, %c0_3] : memref<256x256xbf16, #tpu.memory_space<vmem>>, vector<256x256xbf16>
    %cst = arith.constant dense<0.000000e+00> : vector<24x256xf32>
    %5 = tpu.matmul %3, %4, %cst {dimension_numbers = #tpu.dot_dimension_numbers<[1], [0], [0], [1], [0, 0, 1, 1], [], []>} : vector<24x256xbf16>, vector<256x256xbf16>, vector<24x256xf32> -> vector<24x256xf32>
    %c0_4 = arith.constant 0 : index
    %c0_5 = arith.constant 0 : index
    %6 = vector.load %arg5[%c0_4, %c0_5] : memref<1x256xf32, #tpu.memory_space<vmem>>, vector<1x256xf32>
    %7 = vector.broadcast %6 : vector<1x256xf32> to vector<24x256xf32>
    %8 = arith.addf %5, %7 : vector<24x256xf32>
    %9 = math.tanh %8 : vector<24x256xf32>
    %c0_6 = arith.constant 0 : index
    %c0_7 = arith.constant 0 : index
    %10 = vector.load %arg9[%c0_6, %c0_7] : memref<24x256xf32, #tpu.memory_space<vmem>>, vector<24x256xf32>
    %11 = arith.truncf %9 : vector<24x256xf32> to vector<24x256xbf16>
    %c0_8 = arith.constant 0 : index
    %c0_9 = arith.constant 0 : index
    %12 = vector.load %arg6[%c0_8, %c0_9] : memref<256x256xbf16, #tpu.memory_space<vmem>>, vector<256x256xbf16>
    %cst_10 = arith.constant dense<0.000000e+00> : vector<24x256xf32>
    %13 = tpu.matmul %11, %12, %cst_10 {dimension_numbers = #tpu.dot_dimension_numbers<[1], [0], [0], [1], [0, 0, 1, 1], [], []>} : vector<24x256xbf16>, vector<256x256xbf16>, vector<24x256xf32> -> vector<24x256xf32>
    %14 = arith.addf %10, %13 : vector<24x256xf32>
    %c0_11 = arith.constant 0 : index
    %c0_12 = arith.constant 0 : index
    %15 = vector.load %arg9[%c0_11, %c0_12] : memref<24x256xf32, #tpu.memory_space<vmem>>, vector<24x256xf32>
    tpu.vector_store %arg9[%c0_11, %c0_12], %14 {strides = array<i32>} : memref<24x256xf32, #tpu.memory_space<vmem>>, vector<24x256xf32>,
    %c0_i32_13 = arith.constant 0 : i32
    %16 = arith.cmpi eq, %arg1, %c0_i32_13 : i32
    %17 = arith.extui %16 : i1 to i32
    %c0_i32_14 = arith.constant 0 : i32
    %18 = arith.cmpi ne, %17, %c0_i32_14 : i32
    scf.if %18 {
      %c0_15 = arith.constant 0 : index
      %c0_16 = arith.constant 0 : index
      %19 = vector.load %arg9[%c0_15, %c0_16] : memref<24x256xf32, #tpu.memory_space<vmem>>, vector<24x256xf32>
      %c0_17 = arith.constant 0 : index
      %c0_18 = arith.constant 0 : index
      %20 = vector.load %arg7[%c0_17, %c0_18] : memref<1x256xf32, #tpu.memory_space<vmem>>, vector<1x256xf32>
      %21 = vector.broadcast %20 : vector<1x256xf32> to vector<24x256xf32>
      %22 = arith.addf %19, %21 : vector<24x256xf32>
      %c0_19 = arith.constant 0 : index
      %c0_20 = arith.constant 0 : index
      %23 = vector.load %arg2[%c0_19, %c0_20] : memref<24x256xf32, #tpu.memory_space<vmem>>, vector<24x256xf32>
      %24 = arith.addf %22, %23 : vector<24x256xf32>
      %c0_21 = arith.constant 0 : index
      %c0_22 = arith.constant 0 : index
      %25 = vector.load %arg8[%c0_21, %c0_22] : memref<24x256xf32, #tpu.memory_space<vmem>>, vector<24x256xf32>
      tpu.vector_store %arg8[%c0_21, %c0_22], %24 {strides = array<i32>} : memref<24x256xf32, #tpu.memory_space<vmem>>, vector<24x256xf32>,
    } else {
    }
    return
  }
  func.func @transform_0(%arg0: i32, %arg1: i32) -> (i32, i32) {
    %c0_i32 = arith.constant 0 : i32
    %c0_i32_0 = arith.constant 0 : i32
    return %arg0, %c0_i32 : i32, i32
  }
  func.func @transform_1(%arg0: i32, %arg1: i32) -> (i32, i32) {
    %c0_i32 = arith.constant 0 : i32
    %c0_i32_0 = arith.constant 0 : i32
    return %arg0, %c0_i32 : i32, i32
  }
  func.func @transform_2(%arg0: i32, %arg1: i32) -> (i32, i32) {
    %c0_i32 = arith.constant 0 : i32
    %c0_i32_0 = arith.constant 0 : i32
    return %c0_i32, %arg1 : i32, i32
  }
  func.func @transform_3(%arg0: i32, %arg1: i32) -> (i32, i32) {
    %c0_i32 = arith.constant 0 : i32
    %c0_i32_0 = arith.constant 0 : i32
    return %c0_i32, %arg1 : i32, i32
  }
  func.func @transform_4(%arg0: i32, %arg1: i32) -> (i32, i32) {
    %c0_i32 = arith.constant 0 : i32
    %c0_i32_0 = arith.constant 0 : i32
    return %arg1, %c0_i32 : i32, i32
  }
  func.func @transform_5(%arg0: i32, %arg1: i32) -> (i32, i32) {
    %c0_i32 = arith.constant 0 : i32
    %c0_i32_0 = arith.constant 0 : i32
    %c0_i32_1 = arith.constant 0 : i32
    return %c0_i32, %c0_i32_0 : i32, i32
  }
  func.func @transform_6(%arg0: i32, %arg1: i32) -> (i32, i32) {
    %c0_i32 = arith.constant 0 : i32
    %c0_i32_0 = arith.constant 0 : i32
    return %arg0, %c0_i32 : i32, i32
  }
}

</mosaic_0001>

<llo_original>
// kernel: tpu_custom_call.1
$region0: #{tpu_custom_call.1}
  #allocation0 [shape = 'u32[]', space=smem, size = 0x4, offset = 0x4, fixed_abs, tag = 'smem constant byte address 0x4 - core index']
  #allocation1 [shape = 'u32[144,128]{1,0:T(1,128)}', space=vmem, size = 0x12000, scoped, tag = 'internal scratch']
  #allocation2 [shape = 'f32[24,256]{1,0:T(8,128)}', space=vmem, size = 0x6000, scoped, tag = 'scratch operand']
  %s0 = inlined_call_operand.hbm [shape: f32[40,256], index: 0, kind: input, shape index: {}]
  %s1 = inlined_call_operand.hbm [shape: bf16[40,256], index: 1, kind: input, shape index: {}]
  %s2 = inlined_call_operand.hbm [shape: bf16[256,256], index: 2, kind: input, shape index: {}]
  %s3 = inlined_call_operand.vmem [shape: f32[1,256], index: 3, kind: input, shape index: {}]
  %s4 = inlined_call_operand.hbm [shape: bf16[256,256], index: 4, kind: input, shape index: {}]
  %s5 = inlined_call_operand.vmem [shape: f32[1,256], index: 5, kind: input, shape index: {}]
  %s6 = inlined_call_operand.hbm [shape: f32[40,256], index: 6, kind: output, shape index: {}]
  %s7 = sld [smem:[#allocation0]]
  $region81: #{tpu_custom_call.1} parent=0
    _
  %s9 = ssub.s32 1, %s7
  %s10 = scalar_select 0, %s9, %s7
  $region1: #{tpu_custom_call.1} parent=0
    #allocation3 [shape = 'u8[49152]{0}', space=vmem, size = 0xc000, scoped, tag = 'input window, operand 0']
    #allocation4 [shape = 's32[2]{0}', space=sflag, size = 0x8, scoped, tag = 'scoped memory for tpu_custom_call.1']
    #allocation5 [shape = 's32[2]{0}', space=sflag, size = 0x8, scoped, tag = 'scoped memory for tpu_custom_call.1']
    #allocation6 [shape = 'u8[24576]{0}', space=vmem, size = 0x6000, scoped, tag = 'input window, operand 1']
    #allocation7 [shape = 's32[2]{0}', space=sflag, size = 0x8, scoped, tag = 'scoped memory for tpu_custom_call.1']
    #allocation8 [shape = 'u8[131072]{0}', space=vmem, size = 0x20000, scoped, tag = 'input window, operand 2, single buffered']
    #allocation9 [shape = 'u8[131072]{0}', space=vmem, size = 0x20000, scoped, tag = 'input window, operand 4, single buffered']
    #allocation10 [shape = 's32[1]{0}', space=sflag, size = 0x4, scoped, tag = 'scoped memory for tpu_custom_call.1']
    #allocation11 [shape = 'u8[49152]{0}', space=vmem, size = 0xc000, scoped, tag = 'output window, operand 0']
    %11 = vsyncpa [#allocation4], 0
    %s12 = scalar_lea.sflag [#allocation4], 1
    %13 = vsyncpa %s12, 0
    %14 = vsyncpa [#allocation7], 0
    %s15 = scalar_lea.sflag [#allocation7], 1
    %16 = vsyncpa %s15, 0
    %17 = vsyncpa [#allocation10], 0
    %18 = vsyncpa [#allocation5], 0
    %s19 = scalar_lea.sflag [#allocation5], 1
    %20 = vsyncpa %s19, 0
    loop: start=0, step=1, limit=4
    $region2: #{tpu_custom_call.1} parent=1 // loop_pre_header
      _
    $region3: #{tpu_custom_call.1} parent=1 // loop_header
      %s22 = sphi 0, %s26
      %p23 = scmp.ge.s32.totalorder %s22, 4
      %s29 = sphi 0, %s41
      %s30 = sphi 0, %s37
      %s31 = sphi 0, %s29
      %s32 = sphi 0, %s30
      %s33 = sphi 0, %s31
      %s34 = sphi 0, %s32
      %s44 = sphi 0, %s46
      %s47 = sphi 0, %s44
      %s48 = sphi 0, %s47
      %s64 = sphi 0, %s48
      %s70 = sphi 0, %s72
      %s73 = sphi 0, %s70
      %s74 = sphi 0, %s73
      %s90 = sphi 0, %s74
      %s96 = sphi 0, %s98
      %s99 = sphi 0, %s96
      %s100 = sphi 0, %s99
      %s116 = sphi 0, %s100
      %s122 = sphi 0, %s124
      %s125 = sphi 0, %s122
      %s126 = sphi 0, %s125
      %s142 = sphi 0, %s126
      %s148 = sphi 0, %s150
      %s151 = sphi 0, %s148
      %s152 = sphi 0, %s151
      %s168 = sphi 0, %s152
      %s172 = sphi 0, %s172
      %s174 = sphi 0, %s172
      %s175 = sphi 0, %s174
      %s189 = sphi 0, %s175
      %s195 = sphi 0, %s197
      %s198 = sphi 0, %s195
      %s199 = sphi 0, %s198
      %s215 = sphi 0, %s199
    $region4: #{tpu_custom_call.1} parent=1 // loop_header_branch
      %25 = sbr.rel (%p23) target = $region8
    $region5: #{tpu_custom_call.1} parent=1 // loop_body
      %s27 = ssub.s32 %s22, 1
      %s28 = ssub.s32 %s22, 2
      %s35 = sadd.s32 1, %s30
      %p36 = scmp.ge.s32.totalorder %s35, 1
      %s37 = scalar_select %p36, 0, %s35
      %s38 = sadd.s32 1, %s29
      %s39 = scalar_select %p36, %s38, %s29
      %p40 = scmp.ge.s32.totalorder %s39, 2
      %s41 = scalar_select %p40, 0, %s39
      %s42 = ssub.s32 %s29, %s41
      %p43 = scmp.eq.s32.totalorder %s42, 0
      %s45 = sadd.s32 %s44, 1
      %s46 = scalar_select %p43, %s44, %s45
      %p49 = pneg %p43
      %p50 = scmp.eq.s32.totalorder %s22, 1
      %p51 = por %p49, %p50
      %p52 = scmp.ne.s32.totalorder %s44, %s47
      %p53 = scmp.eq.s32.totalorder %s22, 0
      %p54 = por %p52, %p53
      %p55 = scmp.ne.s32.totalorder %s44, %s47
      %p56 = scmp.eq.s32.totalorder %s27, 1
      %p57 = por %p55, %p56
      %p58 = scmp.ne.s32.totalorder %s47, %s48
      %p59 = scmp.eq.s32.totalorder %s27, 0
      %p60 = por %p58, %p59
      %p61 = scmp.ne.s32.totalorder %s47, %s48
      %p62 = scmp.eq.s32.totalorder %s28, 1
      %p63 = por %p61, %p62
      %p65 = scmp.ne.s32.totalorder %s48, %s64
      %p66 = scmp.eq.s32.totalorder %s28, 0
      %p67 = por %p65, %p66
      %s68 = ssub.s32 %s29, %s41
      %p69 = scmp.eq.s32.totalorder %s68, 0
      %s71 = sadd.s32 %s70, 1
      %s72 = scalar_select %p69, %s70, %s71
      %p75 = pneg %p69
      %p76 = scmp.eq.s32.totalorder %s22, 1
      %p77 = por %p75, %p76
      %p78 = scmp.ne.s32.totalorder %s70, %s73
      %p79 = scmp.eq.s32.totalorder %s22, 0
      %p80 = por %p78, %p79
      %p81 = scmp.ne.s32.totalorder %s70, %s73
      %p82 = scmp.eq.s32.totalorder %s27, 1
      %p83 = por %p81, %p82
      %p84 = scmp.ne.s32.totalorder %s73, %s74
      %p85 = scmp.eq.s32.totalorder %s27, 0
      %p86 = por %p84, %p85
      %p87 = scmp.ne.s32.totalorder %s73, %s74
      %p88 = scmp.eq.s32.totalorder %s28, 1
      %p89 = por %p87, %p88
      %p91 = scmp.ne.s32.totalorder %s74, %s90
      %p92 = scmp.eq.s32.totalorder %s28, 0
      %p93 = por %p91, %p92
      %s94 = ssub.s32 %s30, %s37
      %p95 = scmp.eq.s32.totalorder %s94, 0
      %s97 = sadd.s32 %s96, 1
      %s98 = scalar_select %p95, %s96, %s97
      %p101 = pneg %p95
      %p102 = scmp.eq.s32.totalorder %s22, 1
      %p103 = por %p101, %p102
      %p104 = scmp.ne.s32.totalorder %s96, %s99
      %p105 = scmp.eq.s32.totalorder %s22, 0
      %p106 = por %p104, %p105
      %p107 = scmp.ne.s32.totalorder %s96, %s99
      %p108 = scmp.eq.s32.totalorder %s27, 1
      %p109 = por %p107, %p108
      %p110 = scmp.ne.s32.totalorder %s99, %s100
      %p111 = scmp.eq.s32.totalorder %s27, 0
      %p112 = por %p110, %p111
      %p113 = scmp.ne.s32.totalorder %s99, %s100
      %p114 = scmp.eq.s32.totalorder %s28, 1
      %p115 = por %p113, %p114
      %p117 = scmp.ne.s32.totalorder %s100, %s116
      %p118 = scmp.eq.s32.totalorder %s28, 0
      %p119 = por %p117, %p118
      %s120 = ssub.s32 %s30, %s37
      %p121 = scmp.eq.s32.totalorder %s120, 0
      %s123 = sadd.s32 %s122, 1
      %s124 = scalar_select %p121, %s122, %s123
      %p127 = pneg %p121
      %p128 = scmp.eq.s32.totalorder %s22, 1
      %p129 = por %p127, %p128
      %p130 = scmp.ne.s32.totalorder %s122, %s125
      %p131 = scmp.eq.s32.totalorder %s22, 0
      %p132 = por %p130, %p131
      %p133 = scmp.ne.s32.totalorder %s122, %s125
      %p134 = scmp.eq.s32.totalorder %s27, 1
      %p135 = por %p133, %p134
      %p136 = scmp.ne.s32.totalorder %s125, %s126
      %p137 = scmp.eq.s32.totalorder %s27, 0
      %p138 = por %p136, %p137
      %p139 = scmp.ne.s32.totalorder %s125, %s126
      %p140 = scmp.eq.s32.totalorder %s28, 1
      %p141 = por %p139, %p140
      %p143 = scmp.ne.s32.totalorder %s126, %s142
      %p144 = scmp.eq.s32.totalorder %s28, 0
      %p145 = por %p143, %p144
      %s146 = ssub.s32 %s30, %s37
      %p147 = scmp.eq.s32.totalorder %s146, 0
      %s149 = sadd.s32 %s148, 1
      %s150 = scalar_select %p147, %s148, %s149
      %p153 = pneg %p147
      %p154 = scmp.eq.s32.totalorder %s22, 1
      %p155 = por %p153, %p154
      %p156 = scmp.ne.s32.totalorder %s148, %s151
      %p157 = scmp.eq.s32.totalorder %s22, 0
      %p158 = por %p156, %p157
      %p159 = scmp.ne.s32.totalorder %s148, %s151
      %p160 = scmp.eq.s32.totalorder %s27, 1
      %p161 = por %p159, %p160
      %p162 = scmp.ne.s32.totalorder %s151, %s152
      %p163 = scmp.eq.s32.totalorder %s27, 0
      %p164 = por %p162, %p163
      %p165 = scmp.ne.s32.totalorder %s151, %s152
      %p166 = scmp.eq.s32.totalorder %s28, 1
      %p167 = por %p165, %p166
      %p169 = scmp.ne.s32.totalorder %s152, %s168
      %p170 = scmp.eq.s32.totalorder %s28, 0
      %p171 = por %p169, %p170
      %s173 = sadd.s32 %s172, 1
      %p176 = scmp.eq.s32.totalorder %s22, 1
      %p177 = scmp.ne.s32.totalorder %s172, %s174
      %p178 = scmp.eq.s32.totalorder %s22, 0
      %p179 = por %p177, %p178
      %p180 = scmp.ne.s32.totalorder %s172, %s174
      %p181 = scmp.eq.s32.totalorder %s27, 1
      %p182 = por %p180, %p181
      %p183 = scmp.ne.s32.totalorder %s174, %s175
      %p184 = scmp.eq.s32.totalorder %s27, 0
      %p185 = por %p183, %p184
      %p186 = scmp.ne.s32.totalorder %s174, %s175
      %p187 = scmp.eq.s32.totalorder %s28, 1
      %p188 = por %p186, %p187
      %p190 = scmp.ne.s32.totalorder %s175, %s189
      %p191 = scmp.eq.s32.totalorder %s28, 0
      %p192 = por %p190, %p191
      %s193 = ssub.s32 %s29, %s41
      %p194 = scmp.eq.s32.totalorder %s193, 0
      %s196 = sadd.s32 %s195, 1
      %s197 = scalar_select %p194, %s195, %s196
      %p200 = pneg %p194
      %p201 = scmp.eq.s32.totalorder %s22, 1
      %p202 = por %p200, %p201
      %p203 = scmp.ne.s32.totalorder %s195, %s198
      %p204 = scmp.eq.s32.totalorder %s22, 0
      %p205 = por %p203, %p204
      %p206 = scmp.ne.s32.totalorder %s195, %s198
      %p207 = scmp.eq.s32.totalorder %s27, 1
      %p208 = por %p206, %p207
      %p209 = scmp.ne.s32.totalorder %s198, %s199
      %p210 = scmp.eq.s32.totalorder %s27, 0
      %p211 = por %p209, %p210
      %p212 = scmp.ne.s32.totalorder %s198, %s199
      %p213 = scmp.eq.s32.totalorder %s28, 1
      %p214 = por %p212, %p213
      %p216 = scmp.ne.s32.totalorder %s199, %s215
      %p217 = scmp.eq.s32.totalorder %s28, 0
      %p218 = por %p216, %p217
      %p219 = scmp.le.s32.totalorder 1, %s22
      %p220 = scmp.lt.s32.totalorder %s22, 3
      %p221 = pnand %p219, %p220
      %p222 = pneg %p221
      // Predicated region
      $region9: #{tpu_custom_call.1} parent=5 // pred_check
        _
      $region10: #{tpu_custom_call.1} parent=5 // pred_check_branch
        %224 = sbr.rel (%p221) target = $region12
      $region11: #{tpu_custom_call.1} parent=5 // pred_region
        %s225 = ssub.s32 %s22, 1
        // Predicated region
        $region13: #{tpu_custom_call.1} parent=11 // pred_check
          %p226 = pneg %p112
        $region14: #{tpu_custom_call.1} parent=11 // pred_check_branch
          %228 = sbr.rel (%p226) target = $region16
        $region15: #{tpu_custom_call.1} parent=11 // pred_region
          %s229 = smul.u32 2, %s32
          %s231 = ssub.s32 4096, 4096
          %232 = vsyncadd [#allocation7], %s231
          %s233 = smul.addr %s229, 64
          %s234 = scalar_lea.hbm %s2, %s233
          %s235 = sshll.u32 [#allocation8], 4
          %s236 = int_to_ptr.vmem [resolvable:$true] %s235
          %241 = dma.hbm_to_vmem [thread:$0]  %s234, 4096, %s236, [#allocation7], 128, 128, 8
        $region16: #{tpu_custom_call.1} parent=11 // pred_fallthru
          _
        // Predicated region
        $region17: #{tpu_custom_call.1} parent=11 // pred_check
          %p242 = pneg %p138
        $region18: #{tpu_custom_call.1} parent=11 // pred_check_branch
          %244 = sbr.rel (%p242) target = $region20
        $region19: #{tpu_custom_call.1} parent=11 // pred_region
          %s245 = smul.u32 2, %s32
          %p246 = scmp.lt.s32.totalorder %s245, 1
          %s247 = scalar_select %p246, %s245, 1
          %s248 = scalar_lea.vmem %s3, %s247
          %s249 = smul.u32 2, %s32
        $region20: #{tpu_custom_call.1} parent=11 // pred_fallthru
          _
        // Predicated region
        $region21: #{tpu_custom_call.1} parent=11 // pred_check
          %p250 = pneg %p164
        $region22: #{tpu_custom_call.1} parent=11 // pred_check_branch
          %252 = sbr.rel (%p250) target = $region24
        $region23: #{tpu_custom_call.1} parent=11 // pred_region
          %s253 = smul.u32 32, %s32
          %s255 = ssub.s32 4096, 4096
          %256 = vsyncadd [#allocation10], %s255
          %s257 = smul.addr %s253, 2
          %s258 = smul.addr %s257, 64
          %s259 = scalar_lea.hbm %s4, %s258
          %s260 = sshll.u32 [#allocation9], 4
          %s261 = int_to_ptr.vmem [resolvable:$true] %s260
          %266 = dma.hbm_to_vmem [thread:$0]  %s259, 4096, %s261, [#allocation10], 128, 128, 8
        $region24: #{tpu_custom_call.1} parent=11 // pred_fallthru
          _
        // Predicated region
        $region25: #{tpu_custom_call.1} parent=11 // pred_check
          %p267 = pneg %p185
        $region26: #{tpu_custom_call.1} parent=11 // pred_check_branch
          %269 = sbr.rel (%p267) target = $region28
        $region27: #{tpu_custom_call.1} parent=11 // pred_region
          _
        $region28: #{tpu_custom_call.1} parent=11 // pred_fallthru
          _
      $region12: #{tpu_custom_call.1} parent=5 // pred_fallthru
        _
      %p270 = scmp.lt.s32.totalorder %s22, 2
      // Predicated region
      $region29: #{tpu_custom_call.1} parent=5 // pred_check
        %p271 = pneg %p270
      $region30: #{tpu_custom_call.1} parent=5 // pred_check_branch
        %273 = sbr.rel (%p271) target = $region32
      $region31: #{tpu_custom_call.1} parent=5 // pred_region
        // Predicated region
        $region33: #{tpu_custom_call.1} parent=31 // pred_check
          %p274 = pneg %p54
        $region34: #{tpu_custom_call.1} parent=31 // pred_check_branch
          %276 = sbr.rel (%p274) target = $region36
        $region35: #{tpu_custom_call.1} parent=31 // pred_region
          %s277 = sand.u32 %s44, 1
          %s278 = scalar_lea.sflag [#allocation4], %s277
          %s279 = sand.u32 %s44, 1
          %s280 = smul.addr %s279, 48
          %s281 = scalar_lea.vmem [#allocation3], %s280
          %s282 = smul.u32 3, %s29
          %s283 = ssub.s32 5, %s282
          %p284 = scmp.lt.s32.totalorder %s283, 3
          %s285 = scalar_select %p284, %s283, 3
          %s286 = smul.u32 128, %s285
          %s287 = smul.u32 %s286, 2
          %s289 = ssub.s32 768, %s287
          %290 = vsyncadd %s278, %s289
          %p291 = scmp.ne.s32.totalorder 0, %s287
          %s292 = smul.addr %s282, 2
          %s293 = smul.addr %s292, 128
          %s294 = scalar_lea.hbm %s0, %s293
          %s295 = smul.u32 16, %s285
          %s296 = sshll.u32 %s281, 4
          %s297 = int_to_ptr.vmem [resolvable:$true] %s296
          %s298 = sshll.u32 %s295, 4
          %302 = dma.hbm_to_vmem [thread:$0]  (%p291), %s294, %s298, %s297, %s278, 256, 256, 16
        $region36: #{tpu_custom_call.1} parent=31 // pred_fallthru
          _
        // Predicated region
        $region37: #{tpu_custom_call.1} parent=31 // pred_check
          %p303 = pneg %p80
        $region38: #{tpu_custom_call.1} parent=31 // pred_check_branch
          %305 = sbr.rel (%p303) target = $region40
        $region39: #{tpu_custom_call.1} parent=31 // pred_region
          %s306 = sand.u32 %s22, 1
          %s307 = scalar_lea.sflag [#allocation7], %s306
          %s308 = sand.u32 %s70, 1
          %s309 = smul.addr %s308, 24
          %s310 = scalar_lea.vmem [#allocation6], %s309
          %s311 = smul.u32 3, %s29
          %s312 = ssub.s32 5, %s311
          %p313 = scmp.lt.s32.totalorder %s312, 3
          %s314 = scalar_select %p313, %s312, 3
          %s315 = smul.u32 64, %s314
          %s316 = smul.u32 %s315, 2
          %s318 = ssub.s32 384, %s316
          %319 = vsyncadd %s307, %s318
          %p320 = scmp.ne.s32.totalorder 0, %s316
          %s321 = smul.addr %s311, 2
          %s322 = smul.addr %s321, 64
          %s323 = scalar_lea.hbm %s1, %s322
          %s324 = smul.u32 8, %s314
          %s325 = sshll.u32 %s310, 4
          %s326 = int_to_ptr.vmem [resolvable:$true] %s325
          %s327 = sshll.u32 %s324, 4
          %331 = dma.hbm_to_vmem [thread:$0]  (%p320), %s323, %s327, %s326, %s307, 128, 128, 8
        $region40: #{tpu_custom_call.1} parent=31 // pred_fallthru
          _
      $region32: #{tpu_custom_call.1} parent=5 // pred_fallthru
        _
      %p332 = scmp.le.s32.totalorder 1, %s22
      %p333 = scmp.lt.s32.totalorder %s22, 3
      %p334 = pnand %p332, %p333
      %p335 = pneg %p334
      // Predicated region
      $region41: #{tpu_custom_call.1} parent=5 // pred_check
        _
      $region42: #{tpu_custom_call.1} parent=5 // pred_check_branch
        %337 = sbr.rel (%p334) target = $region44
      $region43: #{tpu_custom_call.1} parent=5 // pred_region
        %s338 = ssub.s32 %s22, 1
        %s339 = sand.u32 %s47, 1
        %s340 = scalar_lea.sflag [#allocation4], %s339
        %s341 = sand.u32 %s47, 1
        %s342 = smul.addr %s341, 48
        %s343 = scalar_lea.vmem [#allocation3], %s342
        // Predicated region
        $region45: #{tpu_custom_call.1} parent=43 // pred_check
          %p344 = pneg %p60
        $region46: #{tpu_custom_call.1} parent=43 // pred_check_branch
          %346 = sbr.rel (%p344) target = $region48
        $region47: #{tpu_custom_call.1} parent=43 // pred_region
          %347 = dma.done %s340, 768
        $region48: #{tpu_custom_call.1} parent=43 // pred_fallthru
          _
        %s348 = sand.u32 %s27, 1
        %s349 = scalar_lea.sflag [#allocation7], %s348
        %s350 = sand.u32 %s73, 1
        %s351 = smul.addr %s350, 24
        %s352 = scalar_lea.vmem [#allocation6], %s351
        // Predicated region
        $region49: #{tpu_custom_call.1} parent=43 // pred_check
          %p353 = pneg %p86
        $region50: #{tpu_custom_call.1} parent=43 // pred_check_branch
          %355 = sbr.rel (%p353) target = $region52
        $region51: #{tpu_custom_call.1} parent=43 // pred_region
          %356 = dma.done %s349, 384
        $region52: #{tpu_custom_call.1} parent=43 // pred_fallthru
          _
        // Predicated region
        $region53: #{tpu_custom_call.1} parent=43 // pred_check
          %p357 = pneg %p112
        $region54: #{tpu_custom_call.1} parent=43 // pred_check_branch
          %359 = sbr.rel (%p357) target = $region56
        $region55: #{tpu_custom_call.1} parent=43 // pred_region
          %360 = dma.done [#allocation7], 4096
        $region56: #{tpu_custom_call.1} parent=43 // pred_fallthru
          _
        // Predicated region
        $region57: #{tpu_custom_call.1} parent=43 // pred_check
          %p361 = pneg %p164
        $region58: #{tpu_custom_call.1} parent=43 // pred_check_branch
          %363 = sbr.rel (%p361) target = $region60
        $region59: #{tpu_custom_call.1} parent=43 // pred_region
          %364 = dma.done [#allocation10], 4096
        $region60: #{tpu_custom_call.1} parent=43 // pred_fallthru
          _
        %s365 = sand.u32 %s47, 1
        %s366 = scalar_lea.sflag [#allocation4], %s365
        %s367 = sand.u32 %s47, 1
        %s368 = smul.addr %s367, 48
        %s369 = scalar_lea.vmem [#allocation3], %s368
        %p370 = pneg %p60
        %p371 = pneg %p57
        %s372 = sand.u32 %s27, 1
        %s373 = scalar_lea.sflag [#allocation7], %s372
        %s374 = sand.u32 %s73, 1
        %s375 = smul.addr %s374, 24
        %s376 = scalar_lea.vmem [#allocation6], %s375
        %p377 = pneg %p86
        %p378 = pneg %p83
        %p379 = pneg %p112
        %p380 = pneg %p109
        %s381 = smul.u32 2, %s32
        %p382 = scmp.lt.s32.totalorder %s381, 1
        %s383 = scalar_select %p382, %s381, 1
        %s384 = scalar_lea.vmem %s3, %s383
        %p385 = pneg %p138
        %p386 = pneg %p135
        %p387 = pneg %p164
        %p388 = pneg %p161
        %p389 = pneg %p185
        %p390 = pneg %p182
        %p391 = pneg %p211
        %p392 = pneg %p208
        %s393 = sand.u32 %s198, 1
        %s394 = scalar_lea.sflag [#allocation5], %s393
        %s395 = sand.u32 %s198, 1
        %s396 = smul.addr %s395, 48
        %s397 = scalar_lea.vmem [#allocation11], %s396
        %s398 = smul.u32 3, %s31
        %s399 = ssub.s32 5, %s398
        %p400 = scmp.lt.s32.totalorder %s399, 3
        %s401 = scalar_select %p400, %s399, 3
        %s402 = smul.u32 128, %s401
        %s403 = smul.u32 %s402, 2
        %s404 = smul.u32 3, %s31
        %s405 = ssub.s32 5, %s404
        %p406 = scmp.lt.s32.totalorder %s405, 3
        %s407 = scalar_select %p406, %s405, 3
        %s408 = smul.u32 64, %s407
        %s409 = smul.u32 %s408, 2
        %s410 = smul.u32 2, %s32
        %s411 = smul.u32 2, %s32
        %p412 = scmp.lt.s32.totalorder %s411, 1
        %s413 = scalar_select %p412, %s411, 1
        %s414 = scalar_lea.vmem %s3, %s413
        %s415 = smul.u32 2, %s32
        %s416 = smul.u32 32, %s32
        %s417 = smul.u32 3, %s31
        %s418 = ssub.s32 5, %s417
        %p419 = scmp.lt.s32.totalorder %s418, 3
        %s420 = scalar_select %p419, %s418, 3
        %s421 = smul.u32 128, %s420
        %s422 = smul.u32 %s421, 2
        %p423 = scmp.eq.s32.totalorder %s32, 0
        // Predicated region
        $region61: #{tpu_custom_call.1} parent=43 // pred_check
          %p424 = pneg %p423
        $region62: #{tpu_custom_call.1} parent=43 // pred_check_branch
          %426 = sbr.rel (%p424) target = $region64
        $region63: #{tpu_custom_call.1} parent=43 // pred_region
          %427 = vst [vmem:[#allocation2] sm:$0xff] 0.0
          %428 = vst [vmem:[#allocation2 + $0x8] sm:$0xff] 0.0
          %429 = vst [vmem:[#allocation2 + $0x10] sm:$0xff] 0.0
          %430 = vst [vmem:[#allocation2 + $0x18] sm:$0xff] 0.0
          %431 = vst [vmem:[#allocation2 + $0x20] sm:$0xff] 0.0
          %432 = vst [vmem:[#allocation2 + $0x28] sm:$0xff] 0.0
        $region64: #{tpu_custom_call.1} parent=43 // pred_fallthru
          _
        %v433 = vld [vmem:[%s352] sm:$0xff]
        %v434 = vld [vmem:[%s352 + $0x8] sm:$0xff]
        %v435 = vld [vmem:[%s352 + $0x10] sm:$0xff]
        %v436 = vld [vmem:[#allocation8] sm:$0xff]
        %v437 = vld [vmem:[#allocation8 + $0x8] sm:$0xff]
        %v438 = vld [vmem:[#allocation8 + $0x10] sm:$0xff]
        %v439 = vld [vmem:[#allocation8 + $0x18] sm:$0xff]
        %v440 = vld [vmem:[#allocation8 + $0x20] sm:$0xff]
        %v441 = vld [vmem:[#allocation8 + $0x28] sm:$0xff]
        %v442 = vld [vmem:[#allocation8 + $0x30] sm:$0xff]
        %v443 = vld [vmem:[#allocation8 + $0x38] sm:$0xff]
        %v444 = vld [vmem:[#allocation8 + $0x40] sm:$0xff]
        %v445 = vld [vmem:[#allocation8 + $0x48] sm:$0xff]
        %v446 = vld [vmem:[#allocation8 + $0x50] sm:$0xff]
        %v447 = vld [vmem:[#allocation8 + $0x58] sm:$0xff]
        %v448 = vld [vmem:[#allocation8 + $0x60] sm:$0xff]
        %v449 = vld [vmem:[#allocation8 + $0x68] sm:$0xff]
        %v450 = vld [vmem:[#allocation8 + $0x70] sm:$0xff]
        %v451 = vld [vmem:[#allocation8 + $0x78] sm:$0xff]
        %v452 = vld [vmem:[#allocation8 + $0x80] sm:$0xff]
        %v453 = vld [vmem:[#allocation8 + $0x88] sm:$0xff]
        %v454 = vld [vmem:[#allocation8 + $0x90] sm:$0xff]
        %v455 = vld [vmem:[#allocation8 + $0x98] sm:$0xff]
        %v456 = vld [vmem:[#allocation8 + $0xa0] sm:$0xff]
        %v457 = vld [vmem:[#allocation8 + $0xa8] sm:$0xff]
        %v458 = vld [vmem:[#allocation8 + $0xb0] sm:$0xff]
        %v459 = vld [vmem:[#allocation8 + $0xb8] sm:$0xff]
        %v460 = vld [vmem:[#allocation8 + $0xc0] sm:$0xff]
        %v461 = vld [vmem:[#allocation8 + $0xc8] sm:$0xff]
        %v462 = vld [vmem:[#allocation8 + $0xd0] sm:$0xff]
        %v463 = vld [vmem:[#allocation8 + $0xd8] sm:$0xff]
        %v464 = vld [vmem:[#allocation8 + $0xe0] sm:$0xff]
        %v465 = vld [vmem:[#allocation8 + $0xe8] sm:$0xff]
        %v466 = vld [vmem:[#allocation8 + $0xf0] sm:$0xff]
        %v467 = vld [vmem:[#allocation8 + $0xf8] sm:$0xff]
        %v468 = vld [vmem:[%s414] sm:$0x3]
        %v470 = vlaneseq
        %v471 = vshrl.u32 %v470, 7
        %v472 = vsub.s32 0, %v471
        %v473 = vrot.slane %v468, %v472
        %v474 = vlaneseq
        %v475 = vshrl.u32 %v474, 7
        %v476 = vsub.s32 1, %v475
        %v477 = vrot.slane %v468, %v476
        %v483 = vunpack.c.l.b16 %v433
        %v484 = vunpack.c.h.b16 %v433
        %v485 = vunpack.c.l.b16 %v434
        %v486 = vunpack.c.h.b16 %v434
        %v487 = vunpack.c.l.b16 %v435
        %v488 = vunpack.c.h.b16 %v435
        %v489 = vpack.c.b16 %v485, %v483
        %v490 = vpack.c.b16 %v486, %v484
        %v491 = vpack.c.b16 %v487, %v487
        %v492 = vpack.c.b16 %v488, %v488
        %v529 = vunpack.c.l.b16 %v436
        %v530 = vunpack.c.h.b16 %v436
        %v531 = vunpack.c.l.b16 %v437
        %v532 = vunpack.c.h.b16 %v437
        %v533 = vunpack.c.l.b16 %v438
        %v534 = vunpack.c.h.b16 %v438
        %v535 = vunpack.c.l.b16 %v439
        %v536 = vunpack.c.h.b16 %v439
        %v537 = vunpack.c.l.b16 %v440
        %v538 = vunpack.c.h.b16 %v440
        %v539 = vunpack.c.l.b16 %v441
        %v540 = vunpack.c.h.b16 %v441
        %v541 = vunpack.c.l.b16 %v442
        %v542 = vunpack.c.h.b16 %v442
        %v543 = vunpack.c.l.b16 %v443
        %v544 = vunpack.c.h.b16 %v443
        %v545 = vunpack.c.l.b16 %v444
        %v546 = vunpack.c.h.b16 %v444
        %v547 = vunpack.c.l.b16 %v445
        %v548 = vunpack.c.h.b16 %v445
        %v549 = vunpack.c.l.b16 %v446
        %v550 = vunpack.c.h.b16 %v446
        %v551 = vunpack.c.l.b16 %v447
        %v552 = vunpack.c.h.b16 %v447
        %v553 = vunpack.c.l.b16 %v448
        %v554 = vunpack.c.h.b16 %v448
        %v555 = vunpack.c.l.b16 %v449
        %v556 = vunpack.c.h.b16 %v449
        %v557 = vunpack.c.l.b16 %v450
        %v558 = vunpack.c.h.b16 %v450
        %v559 = vunpack.c.l.b16 %v451
        %v560 = vunpack.c.h.b16 %v451
        %v561 = vunpack.c.l.b16 %v452
        %v562 = vunpack.c.h.b16 %v452
        %v563 = vunpack.c.l.b16 %v453
        %v564 = vunpack.c.h.b16 %v453
        %v565 = vunpack.c.l.b16 %v454
        %v566 = vunpack.c.h.b16 %v454
        %v567 = vunpack.c.l.b16 %v455
        %v568 = vunpack.c.h.b16 %v455
        %v569 = vunpack.c.l.b16 %v456
        %v570 = vunpack.c.h.b16 %v456
        %v571 = vunpack.c.l.b16 %v457
        %v572 = vunpack.c.h.b16 %v457
        %v573 = vunpack.c.l.b16 %v458
        %v574 = vunpack.c.h.b16 %v458
        %v575 = vunpack.c.l.b16 %v459
        %v576 = vunpack.c.h.b16 %v459
        %v577 = vunpack.c.l.b16 %v460
        %v578 = vunpack.c.h.b16 %v460
        %v579 = vunpack.c.l.b16 %v461
        %v580 = vunpack.c.h.b16 %v461
        %v581 = vunpack.c.l.b16 %v462
        %v582 = vunpack.c.h.b16 %v462
        %v583 = vunpack.c.l.b16 %v463
        %v584 = vunpack.c.h.b16 %v463
        %v585 = vunpack.c.l.b16 %v464
        %v586 = vunpack.c.h.b16 %v464
        %v587 = vunpack.c.l.b16 %v465
        %v588 = vunpack.c.h.b16 %v465
        %v589 = vunpack.c.l.b16 %v466
        %v590 = vunpack.c.h.b16 %v466
        %v591 = vunpack.c.l.b16 %v467
        %v592 = vunpack.c.h.b16 %v467
        %v593 = vpack.c.b16 %v531, %v529
        %v594 = vpack.c.b16 %v532, %v530
        %v595 = vpack.c.b16 %v535, %v533
        %v596 = vpack.c.b16 %v536, %v534
        %v597 = vpack.c.b16 %v539, %v537
        %v598 = vpack.c.b16 %v540, %v538
        %v599 = vpack.c.b16 %v543, %v541
        %v600 = vpack.c.b16 %v544, %v542
        %v601 = vpack.c.b16 %v547, %v545
        %v602 = vpack.c.b16 %v548, %v546
        %v603 = vpack.c.b16 %v551, %v549
        %v604 = vpack.c.b16 %v552, %v550
        %v605 = vpack.c.b16 %v555, %v553
        %v606 = vpack.c.b16 %v556, %v554
        %v607 = vpack.c.b16 %v559, %v557
        %v608 = vpack.c.b16 %v560, %v558
        %v609 = vpack.c.b16 %v563, %v561
        %v610 = vpack.c.b16 %v564, %v562
        %v611 = vpack.c.b16 %v567, %v565
        %v612 = vpack.c.b16 %v568, %v566
        %v613 = vpack.c.b16 %v571, %v569
        %v614 = vpack.c.b16 %v572, %v570
        %v615 = vpack.c.b16 %v575, %v573
        %v616 = vpack.c.b16 %v576, %v574
        %v617 = vpack.c.b16 %v579, %v577
        %v618 = vpack.c.b16 %v580, %v578
        %v619 = vpack.c.b16 %v583, %v581
        %v620 = vpack.c.b16 %v584, %v582
        %v621 = vpack.c.b16 %v587, %v585
        %v622 = vpack.c.b16 %v588, %v586
        %v623 = vpack.c.b16 %v591, %v589
        %v624 = vpack.c.b16 %v592, %v590
        %657 = vmatprep.subr.bf16.mxu0 %v594
        %658 = vmatpush1.bf16.msra.mxu0 %v593
        %659 = vmatprep.subr.bf16.mxu0 %v596
        %660 = vmatpush1.bf16.msra.mxu0 %v595
        %661 = vmatprep.subr.bf16.mxu0 %v598
        %662 = vmatpush1.bf16.msra.mxu0 %v597
        %663 = vmatprep.subr.bf16.mxu0 %v600
        %664 = vmatpush1.bf16.msra.mxu0 %v599
        %665 = vmatprep.subr.bf16.mxu0 %v602
        %666 = vmatpush1.bf16.msra.mxu0 %v601
        %667 = vmatprep.subr.bf16.mxu0 %v604
        %668 = vmatpush1.bf16.msra.mxu0 %v603
        %669 = vmatprep.subr.bf16.mxu0 %v606
        %670 = vmatpush1.bf16.msra.mxu0 %v605
        %671 = vmatprep.subr.bf16.mxu0 %v608
        %672 = vmatpush1.bf16.msra.mxu0 %v607
        %673 = vmatprep.subr.bf16.mxu0 %v610
        %674 = vmatpush1.bf16.msra.mxu0 %v609
        %675 = vmatprep.subr.bf16.mxu0 %v612
        %676 = vmatpush1.bf16.msra.mxu0 %v611
        %677 = vmatprep.subr.bf16.mxu0 %v614
        %678 = vmatpush1.bf16.msra.mxu0 %v613
        %679 = vmatprep.subr.bf16.mxu0 %v616
        %680 = vmatpush1.bf16.msra.mxu0 %v615
        %681 = vmatprep.subr.bf16.mxu0 %v618
        %682 = vmatpush1.bf16.msra.mxu0 %v617
        %683 = vmatprep.subr.bf16.mxu0 %v620
        %684 = vmatpush1.bf16.msra.mxu0 %v619
        %685 = vmatprep.subr.bf16.mxu0 %v622
        %686 = vmatpush1.bf16.msra.mxu0 %v621
        %687 = vmatprep.subr.bf16.mxu0 %v624
        %688 = vmatpush1.bf16.msra.mxu0 %v623
        %689 = vmatprep.mubr.bf16.mxu0 %v490
        %690 = vmatmul.mubr.bf16.gmra.mrb[0].mxu0 %v489
        %v691 = vpop.f32.mrb[0].mxu0
        %v692 = vadd.f32 %v473, %v691
        %v693 = vpop.f32.mrb[0].mxu0
        %v694 = vadd.f32 %v477, %v693
        %v695 = vpop.f32.mrb[0].mxu0
        %v696 = vadd.f32 %v473, %v695
        %v697 = vpop.f32.mrb[0].mxu0
        %v698 = vadd.f32 %v477, %v697
        %699 = vmatprep.mubr.bf16.mxu0 %v492
        %700 = vmatmul.mubr.bf16.gmra.mrb[0].mxu0 %v491
        %v701 = vpop.f32.mrb[0].mxu0
        %v702 = vadd.f32 %v473, %v701
        %v703 = vpop.f32.mrb[0].mxu0
        %v704 = vadd.f32 %v477, %v703
        %v705 = vpop.f32.mrb[0].mxu0
        %v706 = vpop.f32.mrb[0].mxu0
        %707 = vdwg.mxu0
        %v708 = vtanh.pop %v692
        %v709 = vtanh.pop %v694
        %v710 = vtanh.pop %v696
        %v711 = vtanh.pop %v698
        %v712 = vtanh.pop %v702
        %v713 = vtanh.pop %v704
        %v714 = vld [vmem:[#allocation2] sm:$0xff]
        %v715 = vld [vmem:[#allocation2 + $0x8] sm:$0xff]
        %v716 = vld [vmem:[#allocation2 + $0x10] sm:$0xff]
        %v717 = vld [vmem:[#allocation2 + $0x18] sm:$0xff]
        %v718 = vld [vmem:[#allocation2 + $0x20] sm:$0xff]
        %v719 = vld [vmem:[#allocation2 + $0x28] sm:$0xff]
        %v720 = vpack.c.bf16 %v710, %v708
        %v721 = vpack.c.bf16 %v711, %v709
        %v722 = vpack.c.bf16 %v712, %v712
        %v723 = vpack.c.bf16 %v713, %v713
        %v724 = vld [vmem:[#allocation9] sm:$0xff]
        %v725 = vld [vmem:[#allocation9 + $0x8] sm:$0xff]
        %v726 = vld [vmem:[#allocation9 + $0x10] sm:$0xff]
        %v727 = vld [vmem:[#allocation9 + $0x18] sm:$0xff]
        %v728 = vld [vmem:[#allocation9 + $0x20] sm:$0xff]
        %v729 = vld [vmem:[#allocation9 + $0x28] sm:$0xff]
        %v730 = vld [vmem:[#allocation9 + $0x30] sm:$0xff]
        %v731 = vld [vmem:[#allocation9 + $0x38] sm:$0xff]
        %v732 = vld [vmem:[#allocation9 + $0x40] sm:$0xff]
        %v733 = vld [vmem:[#allocation9 + $0x48] sm:$0xff]
        %v734 = vld [vmem:[#allocation9 + $0x50] sm:$0xff]
        %v735 = vld [vmem:[#allocation9 + $0x58] sm:$0xff]
        %v736 = vld [vmem:[#allocation9 + $0x60] sm:$0xff]
        %v737 = vld [vmem:[#allocation9 + $0x68] sm:$0xff]
        %v738 = vld [vmem:[#allocation9 + $0x70] sm:$0xff]
        %v739 = vld [vmem:[#allocation9 + $0x78] sm:$0xff]
        %v740 = vld [vmem:[#allocation9 + $0x80] sm:$0xff]
        %v741 = vld [vmem:[#allocation9 + $0x88] sm:$0xff]
        %v742 = vld [vmem:[#allocation9 + $0x90] sm:$0xff]
        %v743 = vld [vmem:[#allocation9 + $0x98] sm:$0xff]
        %v744 = vld [vmem:[#allocation9 + $0xa0] sm:$0xff]
        %v745 = vld [vmem:[#allocation9 + $0xa8] sm:$0xff]
        %v746 = vld [vmem:[#allocation9 + $0xb0] sm:$0xff]
        %v747 = vld [vmem:[#allocation9 + $0xb8] sm:$0xff]
        %v748 = vld [vmem:[#allocation9 + $0xc0] sm:$0xff]
        %v749 = vld [vmem:[#allocation9 + $0xc8] sm:$0xff]
        %v750 = vld [vmem:[#allocation9 + $0xd0] sm:$0xff]
        %v751 = vld [vmem:[#allocation9 + $0xd8] sm:$0xff]
        %v752 = vld [vmem:[#allocation9 + $0xe0] sm:$0xff]
        %v753 = vld [vmem:[#allocation9 + $0xe8] sm:$0xff]
        %v754 = vld [vmem:[#allocation9 + $0xf0] sm:$0xff]
        %v755 = vld [vmem:[#allocation9 + $0xf8] sm:$0xff]
        %v788 = vunpack.c.l.b16 %v724
        %v789 = vunpack.c.h.b16 %v724
        %v790 = vunpack.c.l.b16 %v725
        %v791 = vunpack.c.h.b16 %v725
        %v792 = vunpack.c.l.b16 %v726
        %v793 = vunpack.c.h.b16 %v726
        %v794 = vunpack.c.l.b16 %v727
        %v795 = vunpack.c.h.b16 %v727
        %v796 = vunpack.c.l.b16 %v728
        %v797 = vunpack.c.h.b16 %v728
        %v798 = vunpack.c.l.b16 %v729
        %v799 = vunpack.c.h.b16 %v729
        %v800 = vunpack.c.l.b16 %v730
        %v801 = vunpack.c.h.b16 %v730
        %v802 = vunpack.c.l.b16 %v731
        %v803 = vunpack.c.h.b16 %v731
        %v804 = vunpack.c.l.b16 %v732
        %v805 = vunpack.c.h.b16 %v732
        %v806 = vunpack.c.l.b16 %v733
        %v807 = vunpack.c.h.b16 %v733
        %v808 = vunpack.c.l.b16 %v734
        %v809 = vunpack.c.h.b16 %v734
        %v810 = vunpack.c.l.b16 %v735
        %v811 = vunpack.c.h.b16 %v735
        %v812 = vunpack.c.l.b16 %v736
        %v813 = vunpack.c.h.b16 %v736
        %v814 = vunpack.c.l.b16 %v737
        %v815 = vunpack.c.h.b16 %v737
        %v816 = vunpack.c.l.b16 %v738
        %v817 = vunpack.c.h.b16 %v738
        %v818 = vunpack.c.l.b16 %v739
        %v819 = vunpack.c.h.b16 %v739
        %v820 = vunpack.c.l.b16 %v740
        %v821 = vunpack.c.h.b16 %v740
        %v822 = vunpack.c.l.b16 %v741
        %v823 = vunpack.c.h.b16 %v741
        %v824 = vunpack.c.l.b16 %v742
        %v825 = vunpack.c.h.b16 %v742
        %v826 = vunpack.c.l.b16 %v743
        %v827 = vunpack.c.h.b16 %v743
        %v828 = vunpack.c.l.b16 %v744
        %v829 = vunpack.c.h.b16 %v744
        %v830 = vunpack.c.l.b16 %v745
        %v831 = vunpack.c.h.b16 %v745
        %v832 = vunpack.c.l.b16 %v746
        %v833 = vunpack.c.h.b16 %v746
        %v834 = vunpack.c.l.b16 %v747
        %v835 = vunpack.c.h.b16 %v747
        %v836 = vunpack.c.l.b16 %v748
        %v837 = vunpack.c.h.b16 %v748
        %v838 = vunpack.c.l.b16 %v749
        %v839 = vunpack.c.h.b16 %v749
        %v840 = vunpack.c.l.b16 %v750
        %v841 = vunpack.c.h.b16 %v750
        %v842 = vunpack.c.l.b16 %v751
        %v843 = vunpack.c.h.b16 %v751
        %v844 = vunpack.c.l.b16 %v752
        %v845 = vunpack.c.h.b16 %v752
        %v846 = vunpack.c.l.b16 %v753
        %v847 = vunpack.c.h.b16 %v753
        %v848 = vunpack.c.l.b16 %v754
        %v849 = vunpack.c.h.b16 %v754
        %v850 = vunpack.c.l.b16 %v755
        %v851 = vunpack.c.h.b16 %v755
        %v852 = vpack.c.b16 %v790, %v788
        %v853 = vpack.c.b16 %v791, %v789
        %v854 = vpack.c.b16 %v794, %v792
        %v855 = vpack.c.b16 %v795, %v793
        %v856 = vpack.c.b16 %v798, %v796
        %v857 = vpack.c.b16 %v799, %v797
        %v858 = vpack.c.b16 %v802, %v800
        %v859 = vpack.c.b16 %v803, %v801
        %v860 = vpack.c.b16 %v806, %v804
        %v861 = vpack.c.b16 %v807, %v805
        %v862 = vpack.c.b16 %v810, %v808
        %v863 = vpack.c.b16 %v811, %v809
        %v864 = vpack.c.b16 %v814, %v812
        %v865 = vpack.c.b16 %v815, %v813
        %v866 = vpack.c.b16 %v818, %v816
        %v867 = vpack.c.b16 %v819, %v817
        %v868 = vpack.c.b16 %v822, %v820
        %v869 = vpack.c.b16 %v823, %v821
        %v870 = vpack.c.b16 %v826, %v824
        %v871 = vpack.c.b16 %v827, %v825
        %v872 = vpack.c.b16 %v830, %v828
        %v873 = vpack.c.b16 %v831, %v829
        %v874 = vpack.c.b16 %v834, %v832
        %v875 = vpack.c.b16 %v835, %v833
        %v876 = vpack.c.b16 %v838, %v836
        %v877 = vpack.c.b16 %v839, %v837
        %v878 = vpack.c.b16 %v842, %v840
        %v879 = vpack.c.b16 %v843, %v841
        %v880 = vpack.c.b16 %v846, %v844
        %v881 = vpack.c.b16 %v847, %v845
        %v882 = vpack.c.b16 %v850, %v848
        %v883 = vpack.c.b16 %v851, %v849
        %916 = vmatprep.subr.bf16.mxu0 %v853
        %917 = vmatpush1.bf16.msra.mxu0 %v852
        %918 = vmatprep.subr.bf16.mxu0 %v855
        %919 = vmatpush1.bf16.msra.mxu0 %v854
        %920 = vmatprep.subr.bf16.mxu0 %v857
        %921 = vmatpush1.bf16.msra.mxu0 %v856
        %922 = vmatprep.subr.bf16.mxu0 %v859
        %923 = vmatpush1.bf16.msra.mxu0 %v858
        %924 = vmatprep.subr.bf16.mxu0 %v861
        %925 = vmatpush1.bf16.msra.mxu0 %v860
        %926 = vmatprep.subr.bf16.mxu0 %v863
        %927 = vmatpush1.bf16.msra.mxu0 %v862
        %928 = vmatprep.subr.bf16.mxu0 %v865
        %929 = vmatpush1.bf16.msra.mxu0 %v864
        %930 = vmatprep.subr.bf16.mxu0 %v867
        %931 = vmatpush1.bf16.msra.mxu0 %v866
        %932 = vmatprep.subr.bf16.mxu0 %v869
        %933 = vmatpush1.bf16.msra.mxu0 %v868
        %934 = vmatprep.subr.bf16.mxu0 %v871
        %935 = vmatpush1.bf16.msra.mxu0 %v870
        %936 = vmatprep.subr.bf16.mxu0 %v873
        %937 = vmatpush1.bf16.msra.mxu0 %v872
        %938 = vmatprep.subr.bf16.mxu0 %v875
        %939 = vmatpush1.bf16.msra.mxu0 %v874
        %940 = vmatprep.subr.bf16.mxu0 %v877
        %941 = vmatpush1.bf16.msra.mxu0 %v876
        %942 = vmatprep.subr.bf16.mxu0 %v879
        %943 = vmatpush1.bf16.msra.mxu0 %v878
        %944 = vmatprep.subr.bf16.mxu0 %v881
        %945 = vmatpush1.bf16.msra.mxu0 %v880
        %946 = vmatprep.subr.bf16.mxu0 %v883
        %947 = vmatpush1.bf16.msra.mxu0 %v882
        %948 = vmatprep.mubr.bf16.mxu0 %v721
        %949 = vmatmul.mubr.bf16.gmra.mrb[0].mxu0 %v720
        %v950 = vpop.f32.mrb[0].mxu0
        %v951 = vadd.f32 0.0, %v950
        %v952 = vpop.f32.mrb[0].mxu0
        %v953 = vadd.f32 0.0, %v952
        %v954 = vpop.f32.mrb[0].mxu0
        %v955 = vadd.f32 0.0, %v954
        %v956 = vpop.f32.mrb[0].mxu0
        %v957 = vadd.f32 0.0, %v956
        %958 = vmatprep.mubr.bf16.mxu0 %v723
        %959 = vmatmul.mubr.bf16.gmra.mrb[0].mxu0 %v722
        %v960 = vpop.f32.mrb[0].mxu0
        %v961 = vadd.f32 0.0, %v960
        %v962 = vpop.f32.mrb[0].mxu0
        %v963 = vadd.f32 0.0, %v962
        %v964 = vpop.f32.mrb[0].mxu0
        %v965 = vpop.f32.mrb[0].mxu0
        %966 = vdwg.mxu0
        %v967 = vadd.f32 %v714, %v951
        %v968 = vadd.f32 %v715, %v953
        %v969 = vadd.f32 %v716, %v955
        %v970 = vadd.f32 %v717, %v957
        %v971 = vadd.f32 %v718, %v961
        %v972 = vadd.f32 %v719, %v963
        %973 = vst [vmem:[#allocation2] sm:$0xff] %v967
        %974 = vst [vmem:[#allocation2 + $0x8] sm:$0xff] %v968
        %975 = vst [vmem:[#allocation2 + $0x10] sm:$0xff] %v969
        %976 = vst [vmem:[#allocation2 + $0x18] sm:$0xff] %v970
        %977 = vst [vmem:[#allocation2 + $0x20] sm:$0xff] %v971
        %978 = vst [vmem:[#allocation2 + $0x28] sm:$0xff] %v972
        // Predicated region
        $region65: #{tpu_custom_call.1} parent=43 // pred_check
          %p979 = pneg %p423
        $region66: #{tpu_custom_call.1} parent=43 // pred_check_branch
          %981 = sbr.rel (%p979) target = $region68
        $region67: #{tpu_custom_call.1} parent=43 // pred_region
          %v982 = vld [vmem:[#allocation2] sm:$0xff]
          %v983 = vld [vmem:[#allocation2 + $0x8] sm:$0xff]
          %v984 = vld [vmem:[#allocation2 + $0x10] sm:$0xff]
          %v985 = vld [vmem:[#allocation2 + $0x18] sm:$0xff]
          %v986 = vld [vmem:[#allocation2 + $0x20] sm:$0xff]
          %v987 = vld [vmem:[#allocation2 + $0x28] sm:$0xff]
          %v988 = vld [vmem:[%s5] sm:$0x3]
          %v990 = vlaneseq
          %v991 = vshrl.u32 %v990, 7
          %v992 = vsub.s32 0, %v991
          %v993 = vrot.slane %v988, %v992
          %v994 = vlaneseq
          %v995 = vshrl.u32 %v994, 7
          %v996 = vsub.s32 1, %v995
          %v997 = vrot.slane %v988, %v996
          %v1000 = vadd.f32 %v982, %v993
          %v1001 = vadd.f32 %v983, %v997
          %v1002 = vadd.f32 %v984, %v993
          %v1003 = vadd.f32 %v985, %v997
          %v1004 = vadd.f32 %v986, %v993
          %v1005 = vadd.f32 %v987, %v997
          %v1006 = vld [vmem:[%s343] sm:$0xff]
          %v1007 = vld [vmem:[%s343 + $0x8] sm:$0xff]
          %v1008 = vld [vmem:[%s343 + $0x10] sm:$0xff]
          %v1009 = vld [vmem:[%s343 + $0x18] sm:$0xff]
          %v1010 = vld [vmem:[%s343 + $0x20] sm:$0xff]
          %v1011 = vld [vmem:[%s343 + $0x28] sm:$0xff]
          %v1012 = vadd.f32 %v1000, %v1006
          %v1013 = vadd.f32 %v1001, %v1007
          %v1014 = vadd.f32 %v1002, %v1008
          %v1015 = vadd.f32 %v1003, %v1009
          %v1016 = vadd.f32 %v1004, %v1010
          %v1017 = vadd.f32 %v1005, %v1011
          %1018 = vst [vmem:[%s397] sm:$0xff] %v1012
          %1019 = vst [vmem:[%s397 + $0x8] sm:$0xff] %v1013
          %1020 = vst [vmem:[%s397 + $0x10] sm:$0xff] %v1014
          %1021 = vst [vmem:[%s397 + $0x18] sm:$0xff] %v1015
          %1022 = vst [vmem:[%s397 + $0x20] sm:$0xff] %v1016
          %1023 = vst [vmem:[%s397 + $0x28] sm:$0xff] %v1017
        $region68: #{tpu_custom_call.1} parent=43 // pred_fallthru
          _
        %s1024 = sand.u32 %s198, 1
        %s1025 = scalar_lea.sflag [#allocation5], %s1024
        %s1026 = sand.u32 %s198, 1
        %s1027 = smul.addr %s1026, 48
        %s1028 = scalar_lea.vmem [#allocation11], %s1027
        // Predicated region
        $region69: #{tpu_custom_call.1} parent=43 // pred_check
          %p1029 = pneg %p208
        $region70: #{tpu_custom_call.1} parent=43 // pred_check_branch
          %1031 = sbr.rel (%p1029) target = $region72
        $region71: #{tpu_custom_call.1} parent=43 // pred_region
          %s1032 = smul.u32 3, %s31
          %s1033 = ssub.s32 5, %s1032
          %p1034 = scmp.lt.s32.totalorder %s1033, 3
          %s1035 = scalar_select %p1034, %s1033, 3
          %s1036 = smul.u32 128, %s1035
          %s1037 = smul.u32 %s1036, 2
          %s1039 = ssub.s32 768, %s1037
          %1040 = vsyncadd %s1025, %s1039
          %p1041 = scmp.ne.s32.totalorder 0, %s1037
          %s1042 = smul.addr %s1032, 2
          %s1043 = smul.addr %s1042, 128
          %s1044 = scalar_lea.hbm %s6, %s1043
          %s1045 = smul.u32 16, %s1035
          %s1046 = sshll.u32 %s1028, 4
          %s1047 = int_to_ptr.vmem [resolvable:$true] %s1046
          %s1048 = sshll.u32 %s1045, 4
          %1052 = dma.vmem_to_hbm [thread:$0]  (%p1041), %s1047, %s1048, %s1044, %s1025, 256, 256, 16
        $region72: #{tpu_custom_call.1} parent=43 // pred_fallthru
          _
      $region44: #{tpu_custom_call.1} parent=5 // pred_fallthru
        _
      %p1053 = scmp.le.s32.totalorder 2, %s22
      // Predicated region
      $region73: #{tpu_custom_call.1} parent=5 // pred_check
        %p1054 = pneg %p1053
      $region74: #{tpu_custom_call.1} parent=5 // pred_check_branch
        %1056 = sbr.rel (%p1054) target = $region76
      $region75: #{tpu_custom_call.1} parent=5 // pred_region
        %s1057 = ssub.s32 %s22, 2
        // Predicated region
        $region77: #{tpu_custom_call.1} parent=75 // pred_check
          %p1058 = pneg %p214
        $region78: #{tpu_custom_call.1} parent=75 // pred_check_branch
          %1060 = sbr.rel (%p1058) target = $region80
        $region79: #{tpu_custom_call.1} parent=75 // pred_region
          %s1061 = sand.u32 %s199, 1
          %s1062 = scalar_lea.sflag [#allocation5], %s1061
          %s1063 = sand.u32 %s199, 1
          %s1064 = smul.addr %s1063, 48
          %s1065 = scalar_lea.vmem [#allocation11], %s1064
          %1066 = dma.done %s1062, 768
        $region80: #{tpu_custom_call.1} parent=75 // pred_fallthru
          _
      $region76: #{tpu_custom_call.1} parent=5 // pred_fallthru
        _
    $region6: #{tpu_custom_call.1} parent=1 // loop_footer
      %s26 = sadd.s32 1, %s22
    $region7: #{tpu_custom_call.1} parent=1 // loop_footer_branch
      %21 = sbr.rel target = $region3
    $region8: #{tpu_custom_call.1} parent=1 // loop_exit
      _
    %1067 = vsyncpa [#allocation4], 1
    %s1068 = scalar_lea.sflag [#allocation4], 1
    %1069 = vsyncpa %s1068, 1
    %1070 = vsyncpa [#allocation7], 1
    %s1071 = scalar_lea.sflag [#allocation7], 1
    %1072 = vsyncpa %s1071, 1
    %1073 = vsyncpa [#allocation10], 1
    %1074 = vsyncpa [#allocation5], 1
    %s1075 = scalar_lea.sflag [#allocation5], 1
    %1076 = vsyncpa %s1075, 1

</llo_original>
